<compile_context>
chip_gen: v6e
topology: v6e:2x2x1
jax: 0.10.0
libtpu: 0.0.40
codegen_flags: <defaults>
</compile_context>

<pallas_src>
import jax
import jax.numpy as jnp
from jax.experimental import pallas as pl
from jax.experimental.pallas import tpu as pltpu

LANE = 128   # lane width (last-dim tiling unit)
SUBLANE = 8  # sublane width (second-to-last dim tiling unit)


def _round_up(n, m):
    return ((n + m - 1) // m) * m


def _num_tensorcores():
    # v7x reports 2 TensorCores per chip; v5e/v6e have 1. Conservative fallback.
    try:
        return max(1, int(getattr(jax.devices()[0], "num_cores", 1)))
    except Exception:
        return 1


def battlenet_kernel(x_ref,
                     w1_ref, b1_ref,
                     w2_ref, b2_ref,
                     w3_ref, b3_ref,
                     w4_ref, b4_ref,
                     o_ref):
    # Whole MLP hot path (4 matmuls + 3 ReLUs) fused in VMEM.
    # bf16 MXU operands, f32 accumulation, f32 bias/ReLU.
    x = x_ref[...].astype(jnp.bfloat16)
    h = jnp.dot(x, w1_ref[...], preferred_element_type=jnp.float32) + b1_ref[...]
    h = jnp.maximum(h, 0.0).astype(jnp.bfloat16)
    h = jnp.dot(h, w2_ref[...], preferred_element_type=jnp.float32) + b2_ref[...]
    h = jnp.maximum(h, 0.0).astype(jnp.bfloat16)
    h = jnp.dot(h, w3_ref[...], preferred_element_type=jnp.float32) + b3_ref[...]
    h = jnp.maximum(h, 0.0).astype(jnp.bfloat16)
    out = jnp.dot(h, w4_ref[...], preferred_element_type=jnp.float32) + b4_ref[...]
    o_ref[...] = out.astype(o_ref.dtype)


def prepare_params(params):
    """One-time parameter prep (NOT per forward):
    hidden (lane/N) dims zero-padded to a multiple of 128; the input K dim and
    the output N dim stay unpadded; weights cast to bf16, biases stay f32.
    Zero padding is semantics-preserving: padded weight columns give 0
    pre-activations (zero bias -> ReLU(0)=0) and padded rows multiply zero
    activations."""
    in_size, hidden = params["w1"].shape
    out_size = params["w4"].shape[1]
    hid_p = _round_up(hidden, LANE)

    def padw(w, rows, cols):
        return jnp.pad(w, ((0, rows - w.shape[0]),
                           (0, cols - w.shape[1]))).astype(jnp.bfloat16)

    def padb(b, cols):
        return jnp.pad(b, ((0, 0), (0, cols - b.shape[1]))).astype(jnp.float32)

    return {
        "w1": padw(params["w1"], in_size, hid_p), "b1": padb(params["b1"], hid_p),
        "w2": padw(params["w2"], hid_p, hid_p),   "b2": padb(params["b2"], hid_p),
        "w3": padw(params["w3"], hid_p, hid_p),   "b3": padb(params["b3"], hid_p),
        "w4": padw(params["w4"], hid_p, out_size), "b4": padb(params["b4"], out_size),
    }


def battlenet_forward(x, prepared, *, max_block_batch=512, num_parallel_tiles=None):
    """x: (B, input_size) float32, unpadded.
    prepared: output of prepare_params (padded bf16 weights, f32 biases).
    Returns (B, output_size) float32, matching the PyTorch forward
    (y = x @ W.T + b, with W.T stored as (in, out))."""
    B, in_size = x.shape
    out_size = prepared["w4"].shape[1]

    if num_parallel_tiles is None:
        num_parallel_tiles = _num_tensorcores()
    # Largest batch tile (multiple of 8) covering B in `num_parallel_tiles`
    # grid steps, capped at max_block_batch. cdiv grid -> no batch
    # over-padding; the final partial block (if any) is masked by Pallas.
    tb = _round_up(pl.cdiv(max(B, 1), max(num_parallel_tiles, 1)), SUBLANE)
    tb = max(SUBLANE, min(max_block_batch, tb))
    grid = (pl.cdiv(B, tb),)

    x_spec = pl.BlockSpec((tb, in_size), lambda i: (i, 0))
    out_spec = pl.BlockSpec((tb, out_size), lambda i: (i, 0))

    def resident(a):
        # Constant block index -> DMA'd once, VMEM-resident across batch tiles.
        # TODO(synk): optionally pipeline_mode=pl.Buffered(1) to drop the
        # unused second buffer (~128 KiB); omitted as it is a minor, optional win.
        return pl.BlockSpec(a.shape, lambda i: (0, 0))

    return pl.pallas_call(
        battlenet_kernel,
        out_shape=jax.ShapeDtypeStruct((B, out_size), jnp.float32),
        grid=grid,
        in_specs=[x_spec,
                  resident(prepared["w1"]), resident(prepared["b1"]),
                  resident(prepared["w2"]), resident(prepared["b2"]),
                  resident(prepared["w3"]), resident(prepared["b3"]),
                  resident(prepared["w4"]), resident(prepared["b4"])],
        out_specs=out_spec,
        compiler_params=pltpu.CompilerParams(
            dimension_semantics=("parallel",)),
    )(x,
      prepared["w1"], prepared["b1"],
      prepared["w2"], prepared["b2"],
      prepared["w3"], prepared["b3"],
      prepared["w4"], prepared["b4"])


def init_params(key, input_size, hidden_size, output_size):
    """Deterministic init mimicking PyTorch's default Linear init:
    U(-1/sqrt(fan_in), 1/sqrt(fan_in))."""
    dims = [(input_size, hidden_size),
            (hidden_size, hidden_size),
            (hidden_size, hidden_size),
            (hidden_size, output_size)]
    params = {}
    for idx, (fan_in, fan_out) in enumerate(dims, start=1):
        key, kw, kb = jax.random.split(key, 3)
        bound = 1.0 / jnp.sqrt(jnp.float32(fan_in))
        params[f"w{idx}"] = jax.random.uniform(
            kw, (fan_in, fan_out), jnp.float32, minval=-bound, maxval=bound)
        params[f"b{idx}"] = jax.random.uniform(
            kb, (1, fan_out), jnp.float32, minval=-bound, maxval=bound)
    return params


def reference_forward_f32(x, params):
    h = jnp.maximum(x @ params["w1"] + params["b1"], 0.0)
    h = jnp.maximum(h @ params["w2"] + params["b2"], 0.0)
    h = jnp.maximum(h @ params["w3"] + params["b3"], 0.0)
    return h @ params["w4"] + params["b4"]


def reference_forward_bf16(x, params):
    # Matches the kernel's numerics: bf16 matmul operands, f32 accumulation.
    def dot(a, w):
        return jnp.dot(a.astype(jnp.bfloat16), w.astype(jnp.bfloat16),
                       preferred_element_type=jnp.float32)
    h = jnp.maximum(dot(x, params["w1"]) + params["b1"], 0.0)
    h = jnp.maximum(dot(h, params["w2"]) + params["b2"], 0.0)
    h = jnp.maximum(dot(h, params["w3"]) + params["b3"], 0.0)
    return dot(h, params["w4"]) + params["b4"]


if __name__ == "__main__":
    input_size, hidden_size, output_size = 16, 32, 8
    batch = 256

    key = jax.random.PRNGKey(0)
    key, kx = jax.random.split(key)
    x = jax.random.normal(kx, (batch, input_size), dtype=jnp.float32)
    params = init_params(key, input_size, hidden_size, output_size)

    # One-time parameter prep (padding + bf16 cast), reused every forward.
    prepared = jax.tree_util.tree_map(jax.block_until_ready,
                                      prepare_params(params))

    fwd = jax.jit(battlenet_forward)
    out = fwd(x, prepared)
    out = jax.block_until_ready(out)
    assert out.shape == (batch, output_size)

    # Tight check vs a reference with matching bf16/f32-accum numerics.
    ref_bf16 = reference_forward_bf16(x, params)
    assert jnp.allclose(out, ref_bf16, atol=2e-3, rtol=2e-3)

    # Loose sanity check vs the full-f32 PyTorch-equivalent forward.
    ref_f32 = reference_forward_f32(x, params)
    assert jnp.allclose(out, ref_f32, atol=5e-2, rtol=5e-2)

    print("KERNEL_OK")
</pallas_src>

<mosaic_0001>
module attributes {stable_mosaic.version = 11 : i64} {
  func.func @battlenet_kernel(%arg0: i32, %arg1: memref<256x16xf32, #tpu.memory_space<vmem>>, %arg2: memref<16x128xbf16, #tpu.memory_space<vmem>>, %arg3: memref<1x128xf32, #tpu.memory_space<vmem>>, %arg4: memref<128x128xbf16, #tpu.memory_space<vmem>>, %arg5: memref<1x128xf32, #tpu.memory_space<vmem>>, %arg6: memref<128x128xbf16, #tpu.memory_space<vmem>>, %arg7: memref<1x128xf32, #tpu.memory_space<vmem>>, %arg8: memref<128x8xbf16, #tpu.memory_space<vmem>>, %arg9: memref<1x8xf32, #tpu.memory_space<vmem>>, %arg10: memref<256x8xf32, #tpu.memory_space<vmem>>) attributes {dimension_semantics = [#tpu.dimension_semantics<parallel>], iteration_bounds = array<i64: 1>, scalar_prefetch = 0 : i64, scratch_operands = 0 : i64, tpu.core_type = #tpu.core_type<tc>, window_params = [{transform_indices = @transform_0, window_bounds = array<i64: 256, 16>}, {pipeline_mode = #tpu.pipeline_mode<synchronous>, transform_indices = @transform_1, window_bounds = array<i64: 16, 128>}, {pipeline_mode = #tpu.pipeline_mode<synchronous>, transform_indices = @transform_2, window_bounds = array<i64: 1, 128>}, {pipeline_mode = #tpu.pipeline_mode<synchronous>, transform_indices = @transform_3, window_bounds = array<i64: 128, 128>}, {pipeline_mode = #tpu.pipeline_mode<synchronous>, transform_indices = @transform_4, window_bounds = array<i64: 1, 128>}, {pipeline_mode = #tpu.pipeline_mode<synchronous>, transform_indices = @transform_5, window_bounds = array<i64: 128, 128>}, {pipeline_mode = #tpu.pipeline_mode<synchronous>, transform_indices = @transform_6, window_bounds = array<i64: 1, 128>}, {pipeline_mode = #tpu.pipeline_mode<synchronous>, transform_indices = @transform_7, window_bounds = array<i64: 128, 8>}, {pipeline_mode = #tpu.pipeline_mode<synchronous>, transform_indices = @transform_8, window_bounds = array<i64: 1, 8>}, {transform_indices = @transform_9, window_bounds = array<i64: 256, 8>}]} {
    %c0 = arith.constant 0 : index
    %c0_0 = arith.constant 0 : index
    %0 = vector.load %arg1[%c0, %c0_0] : memref<256x16xf32, #tpu.memory_space<vmem>>, vector<256x16xf32>
    %1 = arith.truncf %0 : vector<256x16xf32> to vector<256x16xbf16>
    %c0_1 = arith.constant 0 : index
    %c0_2 = arith.constant 0 : index
    %2 = vector.load %arg2[%c0_1, %c0_2] : memref<16x128xbf16, #tpu.memory_space<vmem>>, vector<16x128xbf16>
    %cst = arith.constant dense<0.000000e+00> : vector<256x128xf32>
    %3 = tpu.matmul %1, %2, %cst {dimension_numbers = #tpu.dot_dimension_numbers<[1], [0], [0], [1], [0, 0, 1, 1], [], []>} : vector<256x16xbf16>, vector<16x128xbf16>, vector<256x128xf32> -> vector<256x128xf32>
    %c0_3 = arith.constant 0 : index
    %c0_4 = arith.constant 0 : index
    %4 = vector.load %arg3[%c0_3, %c0_4] : memref<1x128xf32, #tpu.memory_space<vmem>>, vector<1x128xf32>
    %5 = vector.broadcast %4 : vector<1x128xf32> to vector<256x128xf32>
    %6 = arith.addf %3, %5 : vector<256x128xf32>
    %cst_5 = arith.constant 0.000000e+00 : f32
    %7 = vector.broadcast %cst_5 : f32 to vector<256x128xf32>
    %8 = arith.maximumf %6, %7 : vector<256x128xf32>
    %9 = arith.truncf %8 : vector<256x128xf32> to vector<256x128xbf16>
    %c0_6 = arith.constant 0 : index
    %c0_7 = arith.constant 0 : index
    %10 = vector.load %arg4[%c0_6, %c0_7] : memref<128x128xbf16, #tpu.memory_space<vmem>>, vector<128x128xbf16>
    %cst_8 = arith.constant dense<0.000000e+00> : vector<256x128xf32>
    %11 = tpu.matmul %9, %10, %cst_8 {dimension_numbers = #tpu.dot_dimension_numbers<[1], [0], [0], [1], [0, 0, 1, 1], [], []>} : vector<256x128xbf16>, vector<128x128xbf16>, vector<256x128xf32> -> vector<256x128xf32>
    %c0_9 = arith.constant 0 : index
    %c0_10 = arith.constant 0 : index
    %12 = vector.load %arg5[%c0_9, %c0_10] : memref<1x128xf32, #tpu.memory_space<vmem>>, vector<1x128xf32>
    %13 = vector.broadcast %12 : vector<1x128xf32> to vector<256x128xf32>
    %14 = arith.addf %11, %13 : vector<256x128xf32>
    %cst_11 = arith.constant 0.000000e+00 : f32
    %15 = vector.broadcast %cst_11 : f32 to vector<256x128xf32>
    %16 = arith.maximumf %14, %15 : vector<256x128xf32>
    %17 = arith.truncf %16 : vector<256x128xf32> to vector<256x128xbf16>
    %c0_12 = arith.constant 0 : index
    %c0_13 = arith.constant 0 : index
    %18 = vector.load %arg6[%c0_12, %c0_13] : memref<128x128xbf16, #tpu.memory_space<vmem>>, vector<128x128xbf16>
    %cst_14 = arith.constant dense<0.000000e+00> : vector<256x128xf32>
    %19 = tpu.matmul %17, %18, %cst_14 {dimension_numbers = #tpu.dot_dimension_numbers<[1], [0], [0], [1], [0, 0, 1, 1], [], []>} : vector<256x128xbf16>, vector<128x128xbf16>, vector<256x128xf32> -> vector<256x128xf32>
    %c0_15 = arith.constant 0 : index
    %c0_16 = arith.constant 0 : index
    %20 = vector.load %arg7[%c0_15, %c0_16] : memref<1x128xf32, #tpu.memory_space<vmem>>, vector<1x128xf32>
    %21 = vector.broadcast %20 : vector<1x128xf32> to vector<256x128xf32>
    %22 = arith.addf %19, %21 : vector<256x128xf32>
    %cst_17 = arith.constant 0.000000e+00 : f32
    %23 = vector.broadcast %cst_17 : f32 to vector<256x128xf32>
    %24 = arith.maximumf %22, %23 : vector<256x128xf32>
    %25 = arith.truncf %24 : vector<256x128xf32> to vector<256x128xbf16>
    %c0_18 = arith.constant 0 : index
    %c0_19 = arith.constant 0 : index
    %26 = vector.load %arg8[%c0_18, %c0_19] : memref<128x8xbf16, #tpu.memory_space<vmem>>, vector<128x8xbf16>
    %cst_20 = arith.constant dense<0.000000e+00> : vector<256x8xf32>
    %27 = tpu.matmul %25, %26, %cst_20 {dimension_numbers = #tpu.dot_dimension_numbers<[1], [0], [0], [1], [0, 0, 1, 1], [], []>} : vector<256x128xbf16>, vector<128x8xbf16>, vector<256x8xf32> -> vector<256x8xf32>
    %c0_21 = arith.constant 0 : index
    %c0_22 = arith.constant 0 : index
    %28 = vector.load %arg9[%c0_21, %c0_22] : memref<1x8xf32, #tpu.memory_space<vmem>>, vector<1x8xf32>
    %29 = vector.broadcast %28 : vector<1x8xf32> to vector<256x8xf32>
    %30 = arith.addf %27, %29 : vector<256x8xf32>
    %c0_23 = arith.constant 0 : index
    %c0_24 = arith.constant 0 : index
    %31 = vector.load %arg10[%c0_23, %c0_24] : memref<256x8xf32, #tpu.memory_space<vmem>>, vector<256x8xf32>
    tpu.vector_store %arg10[%c0_23, %c0_24], %30 {strides = array<i32>} : memref<256x8xf32, #tpu.memory_space<vmem>>, vector<256x8xf32>,
    return
  }
  func.func @transform_0(%arg0: i32) -> (i32, i32) {
    %c0_i32 = arith.constant 0 : i32
    %c0_i32_0 = arith.constant 0 : i32
    return %arg0, %c0_i32 : i32, i32
  }
  func.func @transform_1(%arg0: i32) -> (i32, i32) {
    %c0_i32 = arith.constant 0 : i32
    %c0_i32_0 = arith.constant 0 : i32
    %c0_i32_1 = arith.constant 0 : i32
    return %c0_i32, %c0_i32_0 : i32, i32
  }
  func.func @transform_2(%arg0: i32) -> (i32, i32) {
    %c0_i32 = arith.constant 0 : i32
    %c0_i32_0 = arith.constant 0 : i32
    %c0_i32_1 = arith.constant 0 : i32
    return %c0_i32, %c0_i32_0 : i32, i32
  }
  func.func @transform_3(%arg0: i32) -> (i32, i32) {
    %c0_i32 = arith.constant 0 : i32
    %c0_i32_0 = arith.constant 0 : i32
    %c0_i32_1 = arith.constant 0 : i32
    return %c0_i32, %c0_i32_0 : i32, i32
  }
  func.func @transform_4(%arg0: i32) -> (i32, i32) {
    %c0_i32 = arith.constant 0 : i32
    %c0_i32_0 = arith.constant 0 : i32
    %c0_i32_1 = arith.constant 0 : i32
    return %c0_i32, %c0_i32_0 : i32, i32
  }
  func.func @transform_5(%arg0: i32) -> (i32, i32) {
    %c0_i32 = arith.constant 0 : i32
    %c0_i32_0 = arith.constant 0 : i32
    %c0_i32_1 = arith.constant 0 : i32
    return %c0_i32, %c0_i32_0 : i32, i32
  }
  func.func @transform_6(%arg0: i32) -> (i32, i32) {
    %c0_i32 = arith.constant 0 : i32
    %c0_i32_0 = arith.constant 0 : i32
    %c0_i32_1 = arith.constant 0 : i32
    return %c0_i32, %c0_i32_0 : i32, i32
  }
  func.func @transform_7(%arg0: i32) -> (i32, i32) {
    %c0_i32 = arith.constant 0 : i32
    %c0_i32_0 = arith.constant 0 : i32
    %c0_i32_1 = arith.constant 0 : i32
    return %c0_i32, %c0_i32_0 : i32, i32
  }
  func.func @transform_8(%arg0: i32) -> (i32, i32) {
    %c0_i32 = arith.constant 0 : i32
    %c0_i32_0 = arith.constant 0 : i32
    %c0_i32_1 = arith.constant 0 : i32
    return %c0_i32, %c0_i32_0 : i32, i32
  }
  func.func @transform_9(%arg0: i32) -> (i32, i32) {
    %c0_i32 = arith.constant 0 : i32
    %c0_i32_0 = arith.constant 0 : i32
    return %arg0, %c0_i32 : i32, i32
  }
}

</mosaic_0001>

<llo_original>
// kernel: battlenet_forward.1
$region0: #{battlenet_forward.1}
  #allocation0 [shape = 'u32[]', space=smem, size = 0x4, offset = 0x4, fixed_abs, tag = 'smem constant byte address 0x4 - core index']
  #allocation1 [shape = 'u32[144,128]{1,0:T(1,128)}', space=vmem, size = 0x12000, scoped, tag = 'internal scratch']
  %s0 = inlined_call_operand.vmem [shape: f32[256,16], index: 0, kind: input, shape index: {}]
  %s1 = inlined_call_operand.vmem [shape: bf16[16,128], index: 1, kind: input, shape index: {}]
  %s2 = inlined_call_operand.vmem [shape: f32[1,128], index: 2, kind: input, shape index: {}]
  %s3 = inlined_call_operand.vmem [shape: bf16[128,128], index: 3, kind: input, shape index: {}]
  %s4 = inlined_call_operand.vmem [shape: f32[1,128], index: 4, kind: input, shape index: {}]
  %s5 = inlined_call_operand.vmem [shape: bf16[128,128], index: 5, kind: input, shape index: {}]
  %s6 = inlined_call_operand.vmem [shape: f32[1,128], index: 6, kind: input, shape index: {}]
  %s7 = inlined_call_operand.vmem [shape: bf16[128,8], index: 7, kind: input, shape index: {}]
  %s8 = inlined_call_operand.vmem [shape: f32[1,8], index: 8, kind: input, shape index: {}]
  %s9 = inlined_call_operand.vmem [shape: f32[256,8], index: 9, kind: output, shape index: {}]
  %s10 = sld [smem:[#allocation0]]
  $region46: #{battlenet_forward.1} parent=0
    _
  %s12 = ssub.s32 1, %s10
  %s13 = scalar_select 0, %s12, %s10
  // Predicated region
  $region2: #{battlenet_forward.1} parent=0 // pred_check
    _
  $region3: #{battlenet_forward.1} parent=0 // pred_check_branch
    %15 = sbr.rel (0) target = $region5
  $region4: #{battlenet_forward.1} parent=0 // pred_region
    _
  $region5: #{battlenet_forward.1} parent=0 // pred_fallthru
    _
  // Predicated region
  $region6: #{battlenet_forward.1} parent=0 // pred_check
    _
  $region7: #{battlenet_forward.1} parent=0 // pred_check_branch
    %17 = sbr.rel (0) target = $region9
  $region8: #{battlenet_forward.1} parent=0 // pred_region
    _
  $region9: #{battlenet_forward.1} parent=0 // pred_fallthru
    _
  // Predicated region
  $region10: #{battlenet_forward.1} parent=0 // pred_check
    _
  $region11: #{battlenet_forward.1} parent=0 // pred_check_branch
    %19 = sbr.rel (0) target = $region13
  $region12: #{battlenet_forward.1} parent=0 // pred_region
    _
  $region13: #{battlenet_forward.1} parent=0 // pred_fallthru
    _
  // Predicated region
  $region14: #{battlenet_forward.1} parent=0 // pred_check
    _
  $region15: #{battlenet_forward.1} parent=0 // pred_check_branch
    %21 = sbr.rel (0) target = $region17
  $region16: #{battlenet_forward.1} parent=0 // pred_region
    _
  $region17: #{battlenet_forward.1} parent=0 // pred_fallthru
    _
  // Predicated region
  $region18: #{battlenet_forward.1} parent=0 // pred_check
    _
  $region19: #{battlenet_forward.1} parent=0 // pred_check_branch
    %23 = sbr.rel (0) target = $region21
  $region20: #{battlenet_forward.1} parent=0 // pred_region
    _
  $region21: #{battlenet_forward.1} parent=0 // pred_fallthru
    _
  // Predicated region
  $region22: #{battlenet_forward.1} parent=0 // pred_check
    _
  $region23: #{battlenet_forward.1} parent=0 // pred_check_branch
    %25 = sbr.rel (0) target = $region25
  $region24: #{battlenet_forward.1} parent=0 // pred_region
    _
  $region25: #{battlenet_forward.1} parent=0 // pred_fallthru
    _
  // Predicated region
  $region26: #{battlenet_forward.1} parent=0 // pred_check
    _
  $region27: #{battlenet_forward.1} parent=0 // pred_check_branch
    %27 = sbr.rel (0) target = $region29
  $region28: #{battlenet_forward.1} parent=0 // pred_region
    _
  $region29: #{battlenet_forward.1} parent=0 // pred_fallthru
    _
  // Predicated region
  $region30: #{battlenet_forward.1} parent=0 // pred_check
    _
  $region31: #{battlenet_forward.1} parent=0 // pred_check_branch
    %29 = sbr.rel (0) target = $region33
  $region32: #{battlenet_forward.1} parent=0 // pred_region
    _
  $region33: #{battlenet_forward.1} parent=0 // pred_fallthru
    _
  // Predicated region
  $region34: #{battlenet_forward.1} parent=0 // pred_check
    _
  $region35: #{battlenet_forward.1} parent=0 // pred_check_branch
    %31 = sbr.rel (0) target = $region37
  $region36: #{battlenet_forward.1} parent=0 // pred_region
    _
  $region37: #{battlenet_forward.1} parent=0 // pred_fallthru
    _
  %v33 = vld [vmem:[%s0] sm:$0xff]
  %v34 = vld [vmem:[%s0 + $0x8] sm:$0xff]
  %v35 = vld [vmem:[%s0 + $0x10] sm:$0xff]
  %v36 = vld [vmem:[%s0 + $0x18] sm:$0xff]
  %v37 = vld [vmem:[%s0 + $0x20] sm:$0xff]
  %v38 = vld [vmem:[%s0 + $0x28] sm:$0xff]
  %v39 = vld [vmem:[%s0 + $0x30] sm:$0xff]
  %v40 = vld [vmem:[%s0 + $0x38] sm:$0xff]
  %v41 = vld [vmem:[%s0 + $0x40] sm:$0xff]
  %v42 = vld [vmem:[%s0 + $0x48] sm:$0xff]
  %v43 = vld [vmem:[%s0 + $0x50] sm:$0xff]
  %v44 = vld [vmem:[%s0 + $0x58] sm:$0xff]
  %v45 = vld [vmem:[%s0 + $0x60] sm:$0xff]
  %v46 = vld [vmem:[%s0 + $0x68] sm:$0xff]
  %v47 = vld [vmem:[%s0 + $0x70] sm:$0xff]
  %v48 = vld [vmem:[%s0 + $0x78] sm:$0xff]
  %v49 = vld [vmem:[%s0 + $0x80] sm:$0xff]
  %v50 = vld [vmem:[%s0 + $0x88] sm:$0xff]
  %v51 = vld [vmem:[%s0 + $0x90] sm:$0xff]
  %v52 = vld [vmem:[%s0 + $0x98] sm:$0xff]
  %v53 = vld [vmem:[%s0 + $0xa0] sm:$0xff]
  %v54 = vld [vmem:[%s0 + $0xa8] sm:$0xff]
  %v55 = vld [vmem:[%s0 + $0xb0] sm:$0xff]
  %v56 = vld [vmem:[%s0 + $0xb8] sm:$0xff]
  %v57 = vld [vmem:[%s0 + $0xc0] sm:$0xff]
  %v58 = vld [vmem:[%s0 + $0xc8] sm:$0xff]
  %v59 = vld [vmem:[%s0 + $0xd0] sm:$0xff]
  %v60 = vld [vmem:[%s0 + $0xd8] sm:$0xff]
  %v61 = vld [vmem:[%s0 + $0xe0] sm:$0xff]
  %v62 = vld [vmem:[%s0 + $0xe8] sm:$0xff]
  %v63 = vld [vmem:[%s0 + $0xf0] sm:$0xff]
  %v64 = vld [vmem:[%s0 + $0xf8] sm:$0xff]
  %v65 = vpack.c.bf16 %v34, %v33
  %v66 = vpack.c.bf16 %v36, %v35
  %v67 = vpack.c.bf16 %v38, %v37
  %v68 = vpack.c.bf16 %v40, %v39
  %v69 = vpack.c.bf16 %v42, %v41
  %v70 = vpack.c.bf16 %v44, %v43
  %v71 = vpack.c.bf16 %v46, %v45
  %v72 = vpack.c.bf16 %v48, %v47
  %v73 = vpack.c.bf16 %v50, %v49
  %v74 = vpack.c.bf16 %v52, %v51
  %v75 = vpack.c.bf16 %v54, %v53
  %v76 = vpack.c.bf16 %v56, %v55
  %v77 = vpack.c.bf16 %v58, %v57
  %v78 = vpack.c.bf16 %v60, %v59
  %v79 = vpack.c.bf16 %v62, %v61
  %v80 = vpack.c.bf16 %v64, %v63
  %v81 = vld [vmem:[%s1] sm:$0xf]
  %v82 = vld [vmem:[%s1 + $0x4] sm:$0xf]
  %v83 = vld [vmem:[%s2] sm:$0x1]
  %v85 = vlaneseq
  %v86 = vshrl.u32 %v85, 7
  %v87 = vsub.s32 0, %v86
  %v88 = vrot.slane %v83, %v87
  %v92 = vunpack.c.l.b16 %v81
  %v93 = vunpack.c.l.b16 %v82
  %v94 = vpack.c.b16 %v93, %v92
  %vm96 = vcmask 130048
  %v98 = vsel %vm96, %v65, 0
  %v101 = vsel %vm96, %v66, 0
  %v104 = vsel %vm96, %v67, 0
  %v107 = vsel %vm96, %v68, 0
  %v110 = vsel %vm96, %v69, 0
  %v113 = vsel %vm96, %v70, 0
  %v116 = vsel %vm96, %v71, 0
  %v119 = vsel %vm96, %v72, 0
  %v122 = vsel %vm96, %v73, 0
  %v125 = vsel %vm96, %v74, 0
  %v128 = vsel %vm96, %v75, 0
  %v131 = vsel %vm96, %v76, 0
  %v134 = vsel %vm96, %v77, 0
  %v137 = vsel %vm96, %v78, 0
  %v140 = vsel %vm96, %v79, 0
  %v143 = vsel %vm96, %v80, 0
  %145 = vmatprep.subr.bf16.mxu0 0
  %146 = vmatpush1.bf16.msra.mxu0 0
  %147 = vmatprep.subr.bf16.mxu0 0
  %148 = vmatpush1.bf16.msra.mxu0 0
  %149 = vmatprep.subr.bf16.mxu0 0
  %150 = vmatpush1.bf16.msra.mxu0 0
  %151 = vmatprep.subr.bf16.mxu0 0
  %152 = vmatpush1.bf16.msra.mxu0 0
  %153 = vmatprep.subr.bf16.mxu0 0
  %154 = vmatpush1.bf16.msra.mxu0 0
  %155 = vmatprep.subr.bf16.mxu0 0
  %156 = vmatpush1.bf16.msra.mxu0 0
  %157 = vmatprep.subr.bf16.mxu0 0
  %158 = vmatpush1.bf16.msra.mxu0 0
  %159 = vmatprep.subr.bf16.mxu0 0
  %160 = vmatpush1.bf16.msra.mxu0 %v94
  %161 = vmatprep.subr.bf16.mxu0 0
  %162 = vmatpush2.bf16.msra.mxu0 0
  %163 = vmatprep.subr.bf16.mxu0 0
  %164 = vmatpush2.bf16.msra.mxu0 0
  %165 = vmatprep.subr.bf16.mxu0 0
  %166 = vmatpush2.bf16.msra.mxu0 0
  %167 = vmatprep.subr.bf16.mxu0 0
  %168 = vmatpush2.bf16.msra.mxu0 0
  %169 = vmatprep.subr.bf16.mxu0 0
  %170 = vmatpush2.bf16.msra.mxu0 0
  %171 = vmatprep.subr.bf16.mxu0 0
  %172 = vmatpush2.bf16.msra.mxu0 0
  %173 = vmatprep.subr.bf16.mxu0 0
  %174 = vmatpush2.bf16.msra.mxu0 0
  %175 = vmatprep.subr.bf16.mxu0 0
  %176 = vmatpush2.bf16.msra.mxu0 0
  %177 = vmatprep.mubr.bf16.mxu0 0
  %178 = vmatmul.mubr.bf16.gmra.mxu0 %v98
  %v179 = vpop.f32.mrf.mxu0
  %v180 = vadd.f32 %v88, %v179
  %v181 = vpop.f32.mrf.mxu0
  %v182 = vpop.f32.mrf.mxu0
  %v183 = vadd.f32 %v88, %v182
  %v184 = vpop.f32.mrf.mxu0
  %185 = vmatprep.mubr.bf16.mxu0 0
  %186 = vmatmul.mubr.bf16.gmra.mxu0 %v101
  %v187 = vpop.f32.mrf.mxu0
  %v188 = vadd.f32 %v88, %v187
  %v189 = vpop.f32.mrf.mxu0
  %v190 = vpop.f32.mrf.mxu0
  %v191 = vadd.f32 %v88, %v190
  %v192 = vpop.f32.mrf.mxu0
  %193 = vmatprep.mubr.bf16.mxu0 0
  %194 = vmatmul.mubr.bf16.gmra.mxu0 %v104
  %v195 = vpop.f32.mrf.mxu0
  %v196 = vadd.f32 %v88, %v195
  %v197 = vpop.f32.mrf.mxu0
  %v198 = vpop.f32.mrf.mxu0
  %v199 = vadd.f32 %v88, %v198
  %v200 = vpop.f32.mrf.mxu0
  %201 = vmatprep.mubr.bf16.mxu0 0
  %202 = vmatmul.mubr.bf16.gmra.mxu0 %v107
  %v203 = vpop.f32.mrf.mxu0
  %v204 = vadd.f32 %v88, %v203
  %v205 = vpop.f32.mrf.mxu0
  %v206 = vpop.f32.mrf.mxu0
  %v207 = vadd.f32 %v88, %v206
  %v208 = vpop.f32.mrf.mxu0
  %209 = vmatprep.mubr.bf16.mxu0 0
  %210 = vmatmul.mubr.bf16.gmra.mxu0 %v110
  %v211 = vpop.f32.mrf.mxu0
  %v212 = vadd.f32 %v88, %v211
  %v213 = vpop.f32.mrf.mxu0
  %v214 = vpop.f32.mrf.mxu0
  %v215 = vadd.f32 %v88, %v214
  %v216 = vpop.f32.mrf.mxu0
  %217 = vmatprep.mubr.bf16.mxu0 0
  %218 = vmatmul.mubr.bf16.gmra.mxu0 %v113
  %v219 = vpop.f32.mrf.mxu0
  %v220 = vadd.f32 %v88, %v219
  %v221 = vpop.f32.mrf.mxu0
  %v222 = vpop.f32.mrf.mxu0
  %v223 = vadd.f32 %v88, %v222
  %v224 = vpop.f32.mrf.mxu0
  %225 = vmatprep.mubr.bf16.mxu0 0
  %226 = vmatmul.mubr.bf16.gmra.mxu0 %v116
  %v227 = vpop.f32.mrf.mxu0
  %v228 = vadd.f32 %v88, %v227
  %v229 = vpop.f32.mrf.mxu0
  %v230 = vpop.f32.mrf.mxu0
  %v231 = vadd.f32 %v88, %v230
  %v232 = vpop.f32.mrf.mxu0
  %233 = vmatprep.mubr.bf16.mxu0 0
  %234 = vmatmul.mubr.bf16.gmra.mxu0 %v119
  %v235 = vpop.f32.mrf.mxu0
  %v236 = vadd.f32 %v88, %v235
  %v237 = vpop.f32.mrf.mxu0
  %v238 = vpop.f32.mrf.mxu0
  %v239 = vadd.f32 %v88, %v238
  %v240 = vpop.f32.mrf.mxu0
  %241 = vmatprep.mubr.bf16.mxu0 0
  %242 = vmatmul.mubr.bf16.gmra.mxu0 %v122
  %v243 = vpop.f32.mrf.mxu0
  %v244 = vadd.f32 %v88, %v243
  %v245 = vpop.f32.mrf.mxu0
  %v246 = vpop.f32.mrf.mxu0
  %v247 = vadd.f32 %v88, %v246
  %v248 = vpop.f32.mrf.mxu0
  %249 = vmatprep.mubr.bf16.mxu0 0
  %250 = vmatmul.mubr.bf16.gmra.mxu0 %v125
  %v251 = vpop.f32.mrf.mxu0
  %v252 = vadd.f32 %v88, %v251
  %v253 = vpop.f32.mrf.mxu0
  %v254 = vpop.f32.mrf.mxu0
  %v255 = vadd.f32 %v88, %v254
  %v256 = vpop.f32.mrf.mxu0
  %257 = vmatprep.mubr.bf16.mxu0 0
  %258 = vmatmul.mubr.bf16.gmra.mxu0 %v128
  %v259 = vpop.f32.mrf.mxu0
  %v260 = vadd.f32 %v88, %v259
  %v261 = vpop.f32.mrf.mxu0
  %v262 = vpop.f32.mrf.mxu0
  %v263 = vadd.f32 %v88, %v262
  %v264 = vpop.f32.mrf.mxu0
  %265 = vmatprep.mubr.bf16.mxu0 0
  %266 = vmatmul.mubr.bf16.gmra.mxu0 %v131
  %v267 = vpop.f32.mrf.mxu0
  %v268 = vadd.f32 %v88, %v267
  %v269 = vpop.f32.mrf.mxu0
  %v270 = vpop.f32.mrf.mxu0
  %v271 = vadd.f32 %v88, %v270
  %v272 = vpop.f32.mrf.mxu0
  %273 = vmatprep.mubr.bf16.mxu0 0
  %274 = vmatmul.mubr.bf16.gmra.mxu0 %v134
  %v275 = vpop.f32.mrf.mxu0
  %v276 = vadd.f32 %v88, %v275
  %v277 = vpop.f32.mrf.mxu0
  %v278 = vpop.f32.mrf.mxu0
  %v279 = vadd.f32 %v88, %v278
  %v280 = vpop.f32.mrf.mxu0
  %281 = vmatprep.mubr.bf16.mxu0 0
  %282 = vmatmul.mubr.bf16.gmra.mxu0 %v137
  %v283 = vpop.f32.mrf.mxu0
  %v284 = vadd.f32 %v88, %v283
  %v285 = vpop.f32.mrf.mxu0
  %v286 = vpop.f32.mrf.mxu0
  %v287 = vadd.f32 %v88, %v286
  %v288 = vpop.f32.mrf.mxu0
  %289 = vmatprep.mubr.bf16.mxu0 0
  %290 = vmatmul.mubr.bf16.gmra.mxu0 %v140
  %v291 = vpop.f32.mrf.mxu0
  %v292 = vadd.f32 %v88, %v291
  %v293 = vpop.f32.mrf.mxu0
  %v294 = vpop.f32.mrf.mxu0
  %v295 = vadd.f32 %v88, %v294
  %v296 = vpop.f32.mrf.mxu0
  %297 = vmatprep.mubr.bf16.mxu0 0
  %298 = vmatmul.mubr.bf16.gmra.mxu0 %v143
  %v299 = vpop.f32.mrf.mxu0
  %v300 = vadd.f32 %v88, %v299
  %v301 = vpop.f32.mrf.mxu0
  %v302 = vpop.f32.mrf.mxu0
  %v303 = vadd.f32 %v88, %v302
  %v304 = vpop.f32.mrf.mxu0
  %305 = vdwg.mxu0
  %v306 = vmax.f32 %v180, 0.0
  %v307 = vmax.f32 %v183, 0.0
  %v308 = vmax.f32 %v188, 0.0
  %v309 = vmax.f32 %v191, 0.0
  %v310 = vmax.f32 %v196, 0.0
  %v311 = vmax.f32 %v199, 0.0
  %v312 = vmax.f32 %v204, 0.0
  %v313 = vmax.f32 %v207, 0.0
  %v314 = vmax.f32 %v212, 0.0
  %v315 = vmax.f32 %v215, 0.0
  %v316 = vmax.f32 %v220, 0.0
  %v317 = vmax.f32 %v223, 0.0
  %v318 = vmax.f32 %v228, 0.0
  %v319 = vmax.f32 %v231, 0.0
  %v320 = vmax.f32 %v236, 0.0
  %v321 = vmax.f32 %v239, 0.0
  %v322 = vmax.f32 %v244, 0.0
  %v323 = vmax.f32 %v247, 0.0
  %v324 = vmax.f32 %v252, 0.0
  %v325 = vmax.f32 %v255, 0.0
  %v326 = vmax.f32 %v260, 0.0
  %v327 = vmax.f32 %v263, 0.0
  %v328 = vmax.f32 %v268, 0.0
  %v329 = vmax.f32 %v271, 0.0
  %v330 = vmax.f32 %v276, 0.0
  %v331 = vmax.f32 %v279, 0.0
  %v332 = vmax.f32 %v284, 0.0
  %v333 = vmax.f32 %v287, 0.0
  %v334 = vmax.f32 %v292, 0.0
  %v335 = vmax.f32 %v295, 0.0
  %v336 = vmax.f32 %v300, 0.0
  %v337 = vmax.f32 %v303, 0.0
  %v338 = vpack.c.bf16 %v307, %v306
  %v339 = vpack.c.bf16 %v309, %v308
  %v340 = vpack.c.bf16 %v311, %v310
  %v341 = vpack.c.bf16 %v313, %v312
  %v342 = vpack.c.bf16 %v315, %v314
  %v343 = vpack.c.bf16 %v317, %v316
  %v344 = vpack.c.bf16 %v319, %v318
  %v345 = vpack.c.bf16 %v321, %v320
  %v346 = vpack.c.bf16 %v323, %v322
  %v347 = vpack.c.bf16 %v325, %v324
  %v348 = vpack.c.bf16 %v327, %v326
  %v349 = vpack.c.bf16 %v329, %v328
  %v350 = vpack.c.bf16 %v331, %v330
  %v351 = vpack.c.bf16 %v333, %v332
  %v352 = vpack.c.bf16 %v335, %v334
  %v353 = vpack.c.bf16 %v337, %v336
  %v354 = vld [vmem:[%s3] sm:$0xf]
  %v355 = vld [vmem:[%s3 + $0x4] sm:$0xf]
  %v356 = vld [vmem:[%s3 + $0x8] sm:$0xf]
  %v357 = vld [vmem:[%s3 + $0xc] sm:$0xf]
  %v358 = vld [vmem:[%s3 + $0x10] sm:$0xf]
  %v359 = vld [vmem:[%s3 + $0x14] sm:$0xf]
  %v360 = vld [vmem:[%s3 + $0x18] sm:$0xf]
  %v361 = vld [vmem:[%s3 + $0x1c] sm:$0xf]
  %v362 = vld [vmem:[%s3 + $0x20] sm:$0xf]
  %v363 = vld [vmem:[%s3 + $0x24] sm:$0xf]
  %v364 = vld [vmem:[%s3 + $0x28] sm:$0xf]
  %v365 = vld [vmem:[%s3 + $0x2c] sm:$0xf]
  %v366 = vld [vmem:[%s3 + $0x30] sm:$0xf]
  %v367 = vld [vmem:[%s3 + $0x34] sm:$0xf]
  %v368 = vld [vmem:[%s3 + $0x38] sm:$0xf]
  %v369 = vld [vmem:[%s3 + $0x3c] sm:$0xf]
  %v370 = vld [vmem:[%s4] sm:$0x1]
  %v372 = vlaneseq
  %v373 = vshrl.u32 %v372, 7
  %v374 = vsub.s32 0, %v373
  %v375 = vrot.slane %v370, %v374
  %v393 = vunpack.c.l.b16 %v354
  %v394 = vunpack.c.l.b16 %v355
  %v395 = vunpack.c.l.b16 %v356
  %v396 = vunpack.c.l.b16 %v357
  %v397 = vunpack.c.l.b16 %v358
  %v398 = vunpack.c.l.b16 %v359
  %v399 = vunpack.c.l.b16 %v360
  %v400 = vunpack.c.l.b16 %v361
  %v401 = vunpack.c.l.b16 %v362
  %v402 = vunpack.c.l.b16 %v363
  %v403 = vunpack.c.l.b16 %v364
  %v404 = vunpack.c.l.b16 %v365
  %v405 = vunpack.c.l.b16 %v366
  %v406 = vunpack.c.l.b16 %v367
  %v407 = vunpack.c.l.b16 %v368
  %v408 = vunpack.c.l.b16 %v369
  %v409 = vpack.c.b16 %v394, %v393
  %v410 = vpack.c.b16 %v396, %v395
  %v411 = vpack.c.b16 %v398, %v397
  %v412 = vpack.c.b16 %v400, %v399
  %v413 = vpack.c.b16 %v402, %v401
  %v414 = vpack.c.b16 %v404, %v403
  %v415 = vpack.c.b16 %v406, %v405
  %v416 = vpack.c.b16 %v408, %v407
  %425 = vmatprep.subr.bf16.mxu0 0
  %426 = vmatpush1.bf16.msra.mxu0 %v416
  %427 = vmatprep.subr.bf16.mxu0 0
  %428 = vmatpush1.bf16.msra.mxu0 %v415
  %429 = vmatprep.subr.bf16.mxu0 0
  %430 = vmatpush1.bf16.msra.mxu0 %v414
  %431 = vmatprep.subr.bf16.mxu0 0
  %432 = vmatpush1.bf16.msra.mxu0 %v413
  %433 = vmatprep.subr.bf16.mxu0 0
  %434 = vmatpush1.bf16.msra.mxu0 %v412
  %435 = vmatprep.subr.bf16.mxu0 0
  %436 = vmatpush1.bf16.msra.mxu0 %v411
  %437 = vmatprep.subr.bf16.mxu0 0
  %438 = vmatpush1.bf16.msra.mxu0 %v410
  %439 = vmatprep.subr.bf16.mxu0 0
  %440 = vmatpush1.bf16.msra.mxu0 %v409
  %441 = vmatprep.subr.bf16.mxu0 0
  %442 = vmatpush2.bf16.msra.mxu0 0
  %443 = vmatprep.subr.bf16.mxu0 0
  %444 = vmatpush2.bf16.msra.mxu0 0
  %445 = vmatprep.subr.bf16.mxu0 0
  %446 = vmatpush2.bf16.msra.mxu0 0
  %447 = vmatprep.subr.bf16.mxu0 0
  %448 = vmatpush2.bf16.msra.mxu0 0
  %449 = vmatprep.subr.bf16.mxu0 0
  %450 = vmatpush2.bf16.msra.mxu0 0
  %451 = vmatprep.subr.bf16.mxu0 0
  %452 = vmatpush2.bf16.msra.mxu0 0
  %453 = vmatprep.subr.bf16.mxu0 0
  %454 = vmatpush2.bf16.msra.mxu0 0
  %455 = vmatprep.subr.bf16.mxu0 0
  %456 = vmatpush2.bf16.msra.mxu0 0
  %457 = vmatprep.mubr.bf16.mxu0 0
  %458 = vmatmul.mubr.bf16.gmra.mxu0 %v338
  %v459 = vpop.f32.mrf.mxu0
  %v460 = vadd.f32 %v375, %v459
  %v461 = vpop.f32.mrf.mxu0
  %v462 = vpop.f32.mrf.mxu0
  %v463 = vadd.f32 %v375, %v462
  %v464 = vpop.f32.mrf.mxu0
  %465 = vmatprep.mubr.bf16.mxu0 0
  %466 = vmatmul.mubr.bf16.gmra.mxu0 %v339
  %v467 = vpop.f32.mrf.mxu0
  %v468 = vadd.f32 %v375, %v467
  %v469 = vpop.f32.mrf.mxu0
  %v470 = vpop.f32.mrf.mxu0
  %v471 = vadd.f32 %v375, %v470
  %v472 = vpop.f32.mrf.mxu0
  %473 = vmatprep.mubr.bf16.mxu0 0
  %474 = vmatmul.mubr.bf16.gmra.mxu0 %v340
  %v475 = vpop.f32.mrf.mxu0
  %v476 = vadd.f32 %v375, %v475
  %v477 = vpop.f32.mrf.mxu0
  %v478 = vpop.f32.mrf.mxu0
  %v479 = vadd.f32 %v375, %v478
  %v480 = vpop.f32.mrf.mxu0
  %481 = vmatprep.mubr.bf16.mxu0 0
  %482 = vmatmul.mubr.bf16.gmra.mxu0 %v341
  %v483 = vpop.f32.mrf.mxu0
  %v484 = vadd.f32 %v375, %v483
  %v485 = vpop.f32.mrf.mxu0
  %v486 = vpop.f32.mrf.mxu0
  %v487 = vadd.f32 %v375, %v486
  %v488 = vpop.f32.mrf.mxu0
  %489 = vmatprep.mubr.bf16.mxu0 0
  %490 = vmatmul.mubr.bf16.gmra.mxu0 %v342
  %v491 = vpop.f32.mrf.mxu0
  %v492 = vadd.f32 %v375, %v491
  %v493 = vpop.f32.mrf.mxu0
  %v494 = vpop.f32.mrf.mxu0
  %v495 = vadd.f32 %v375, %v494
  %v496 = vpop.f32.mrf.mxu0
  %497 = vmatprep.mubr.bf16.mxu0 0
  %498 = vmatmul.mubr.bf16.gmra.mxu0 %v343
  %v499 = vpop.f32.mrf.mxu0
  %v500 = vadd.f32 %v375, %v499
  %v501 = vpop.f32.mrf.mxu0
  %v502 = vpop.f32.mrf.mxu0
  %v503 = vadd.f32 %v375, %v502
  %v504 = vpop.f32.mrf.mxu0
  %505 = vmatprep.mubr.bf16.mxu0 0
  %506 = vmatmul.mubr.bf16.gmra.mxu0 %v344
  %v507 = vpop.f32.mrf.mxu0
  %v508 = vadd.f32 %v375, %v507
  %v509 = vpop.f32.mrf.mxu0
  %v510 = vpop.f32.mrf.mxu0
  %v511 = vadd.f32 %v375, %v510
  %v512 = vpop.f32.mrf.mxu0
  %513 = vmatprep.mubr.bf16.mxu0 0
  %514 = vmatmul.mubr.bf16.gmra.mxu0 %v345
  %v515 = vpop.f32.mrf.mxu0
  %v516 = vadd.f32 %v375, %v515
  %v517 = vpop.f32.mrf.mxu0
  %v518 = vpop.f32.mrf.mxu0
  %v519 = vadd.f32 %v375, %v518
  %v520 = vpop.f32.mrf.mxu0
  %521 = vmatprep.mubr.bf16.mxu0 0
  %522 = vmatmul.mubr.bf16.gmra.mxu0 %v346
  %v523 = vpop.f32.mrf.mxu0
  %v524 = vadd.f32 %v375, %v523
  %v525 = vpop.f32.mrf.mxu0
  %v526 = vpop.f32.mrf.mxu0
  %v527 = vadd.f32 %v375, %v526
  %v528 = vpop.f32.mrf.mxu0
  %529 = vmatprep.mubr.bf16.mxu0 0
  %530 = vmatmul.mubr.bf16.gmra.mxu0 %v347
  %v531 = vpop.f32.mrf.mxu0
  %v532 = vadd.f32 %v375, %v531
  %v533 = vpop.f32.mrf.mxu0
  %v534 = vpop.f32.mrf.mxu0
  %v535 = vadd.f32 %v375, %v534
  %v536 = vpop.f32.mrf.mxu0
  %537 = vmatprep.mubr.bf16.mxu0 0
  %538 = vmatmul.mubr.bf16.gmra.mxu0 %v348
  %v539 = vpop.f32.mrf.mxu0
  %v540 = vadd.f32 %v375, %v539
  %v541 = vpop.f32.mrf.mxu0
  %v542 = vpop.f32.mrf.mxu0
  %v543 = vadd.f32 %v375, %v542
  %v544 = vpop.f32.mrf.mxu0
  %545 = vmatprep.mubr.bf16.mxu0 0
  %546 = vmatmul.mubr.bf16.gmra.mxu0 %v349
  %v547 = vpop.f32.mrf.mxu0
  %v548 = vadd.f32 %v375, %v547
  %v549 = vpop.f32.mrf.mxu0
  %v550 = vpop.f32.mrf.mxu0
  %v551 = vadd.f32 %v375, %v550
  %v552 = vpop.f32.mrf.mxu0
  %553 = vmatprep.mubr.bf16.mxu0 0
  %554 = vmatmul.mubr.bf16.gmra.mxu0 %v350
  %v555 = vpop.f32.mrf.mxu0
  %v556 = vadd.f32 %v375, %v555
  %v557 = vpop.f32.mrf.mxu0
  %v558 = vpop.f32.mrf.mxu0
  %v559 = vadd.f32 %v375, %v558
  %v560 = vpop.f32.mrf.mxu0
  %561 = vmatprep.mubr.bf16.mxu0 0
  %562 = vmatmul.mubr.bf16.gmra.mxu0 %v351
  %v563 = vpop.f32.mrf.mxu0
  %v564 = vadd.f32 %v375, %v563
  %v565 = vpop.f32.mrf.mxu0
  %v566 = vpop.f32.mrf.mxu0
  %v567 = vadd.f32 %v375, %v566
  %v568 = vpop.f32.mrf.mxu0
  %569 = vmatprep.mubr.bf16.mxu0 0
  %570 = vmatmul.mubr.bf16.gmra.mxu0 %v352
  %v571 = vpop.f32.mrf.mxu0
  %v572 = vadd.f32 %v375, %v571
  %v573 = vpop.f32.mrf.mxu0
  %v574 = vpop.f32.mrf.mxu0
  %v575 = vadd.f32 %v375, %v574
  %v576 = vpop.f32.mrf.mxu0
  %577 = vmatprep.mubr.bf16.mxu0 0
  %578 = vmatmul.mubr.bf16.gmra.mxu0 %v353
  %v579 = vpop.f32.mrf.mxu0
  %v580 = vadd.f32 %v375, %v579
  %v581 = vpop.f32.mrf.mxu0
  %v582 = vpop.f32.mrf.mxu0
  %v583 = vadd.f32 %v375, %v582
  %v584 = vpop.f32.mrf.mxu0
  %585 = vdwg.mxu0
  %v586 = vmax.f32 %v460, 0.0
  %v587 = vmax.f32 %v463, 0.0
  %v588 = vmax.f32 %v468, 0.0
  %v589 = vmax.f32 %v471, 0.0
  %v590 = vmax.f32 %v476, 0.0
  %v591 = vmax.f32 %v479, 0.0
  %v592 = vmax.f32 %v484, 0.0
  %v593 = vmax.f32 %v487, 0.0
  %v594 = vmax.f32 %v492, 0.0
  %v595 = vmax.f32 %v495, 0.0
  %v596 = vmax.f32 %v500, 0.0
  %v597 = vmax.f32 %v503, 0.0
  %v598 = vmax.f32 %v508, 0.0
  %v599 = vmax.f32 %v511, 0.0
  %v600 = vmax.f32 %v516, 0.0
  %v601 = vmax.f32 %v519, 0.0
  %v602 = vmax.f32 %v524, 0.0
  %v603 = vmax.f32 %v527, 0.0
  %v604 = vmax.f32 %v532, 0.0
  %v605 = vmax.f32 %v535, 0.0
  %v606 = vmax.f32 %v540, 0.0
  %v607 = vmax.f32 %v543, 0.0
  %v608 = vmax.f32 %v548, 0.0
  %v609 = vmax.f32 %v551, 0.0
  %v610 = vmax.f32 %v556, 0.0
  %v611 = vmax.f32 %v559, 0.0
  %v612 = vmax.f32 %v564, 0.0
  %v613 = vmax.f32 %v567, 0.0
  %v614 = vmax.f32 %v572, 0.0
  %v615 = vmax.f32 %v575, 0.0
  %v616 = vmax.f32 %v580, 0.0
  %v617 = vmax.f32 %v583, 0.0
  %v618 = vpack.c.bf16 %v587, %v586
  %v619 = vpack.c.bf16 %v589, %v588
  %v620 = vpack.c.bf16 %v591, %v590
  %v621 = vpack.c.bf16 %v593, %v592
  %v622 = vpack.c.bf16 %v595, %v594
  %v623 = vpack.c.bf16 %v597, %v596
  %v624 = vpack.c.bf16 %v599, %v598
  %v625 = vpack.c.bf16 %v601, %v600
  %v626 = vpack.c.bf16 %v603, %v602
  %v627 = vpack.c.bf16 %v605, %v604
  %v628 = vpack.c.bf16 %v607, %v606
  %v629 = vpack.c.bf16 %v609, %v608
  %v630 = vpack.c.bf16 %v611, %v610
  %v631 = vpack.c.bf16 %v613, %v612
  %v632 = vpack.c.bf16 %v615, %v614
  %v633 = vpack.c.bf16 %v617, %v616
  %v634 = vld [vmem:[%s5] sm:$0xf]
  %v635 = vld [vmem:[%s5 + $0x4] sm:$0xf]
  %v636 = vld [vmem:[%s5 + $0x8] sm:$0xf]
  %v637 = vld [vmem:[%s5 + $0xc] sm:$0xf]
  %v638 = vld [vmem:[%s5 + $0x10] sm:$0xf]
  %v639 = vld [vmem:[%s5 + $0x14] sm:$0xf]
  %v640 = vld [vmem:[%s5 + $0x18] sm:$0xf]
  %v641 = vld [vmem:[%s5 + $0x1c] sm:$0xf]
  %v642 = vld [vmem:[%s5 + $0x20] sm:$0xf]
  %v643 = vld [vmem:[%s5 + $0x24] sm:$0xf]
  %v644 = vld [vmem:[%s5 + $0x28] sm:$0xf]
  %v645 = vld [vmem:[%s5 + $0x2c] sm:$0xf]
  %v646 = vld [vmem:[%s5 + $0x30] sm:$0xf]
  %v647 = vld [vmem:[%s5 + $0x34] sm:$0xf]
  %v648 = vld [vmem:[%s5 + $0x38] sm:$0xf]
  %v649 = vld [vmem:[%s5 + $0x3c] sm:$0xf]
  %v650 = vld [vmem:[%s6] sm:$0x1]
  %v652 = vlaneseq
  %v653 = vshrl.u32 %v652, 7
  %v654 = vsub.s32 0, %v653
  %v655 = vrot.slane %v650, %v654
  %v673 = vunpack.c.l.b16 %v634
  %v674 = vunpack.c.l.b16 %v635
  %v675 = vunpack.c.l.b16 %v636
  %v676 = vunpack.c.l.b16 %v637
  %v677 = vunpack.c.l.b16 %v638
  %v678 = vunpack.c.l.b16 %v639
  %v679 = vunpack.c.l.b16 %v640
  %v680 = vunpack.c.l.b16 %v641
  %v681 = vunpack.c.l.b16 %v642
  %v682 = vunpack.c.l.b16 %v643
  %v683 = vunpack.c.l.b16 %v644
  %v684 = vunpack.c.l.b16 %v645
  %v685 = vunpack.c.l.b16 %v646
  %v686 = vunpack.c.l.b16 %v647
  %v687 = vunpack.c.l.b16 %v648
  %v688 = vunpack.c.l.b16 %v649
  %v689 = vpack.c.b16 %v674, %v673
  %v690 = vpack.c.b16 %v676, %v675
  %v691 = vpack.c.b16 %v678, %v677
  %v692 = vpack.c.b16 %v680, %v679
  %v693 = vpack.c.b16 %v682, %v681
  %v694 = vpack.c.b16 %v684, %v683
  %v695 = vpack.c.b16 %v686, %v685
  %v696 = vpack.c.b16 %v688, %v687
  %705 = vmatprep.subr.bf16.mxu0 0
  %706 = vmatpush1.bf16.msra.mxu0 %v696
  %707 = vmatprep.subr.bf16.mxu0 0
  %708 = vmatpush1.bf16.msra.mxu0 %v695
  %709 = vmatprep.subr.bf16.mxu0 0
  %710 = vmatpush1.bf16.msra.mxu0 %v694
  %711 = vmatprep.subr.bf16.mxu0 0
  %712 = vmatpush1.bf16.msra.mxu0 %v693
  %713 = vmatprep.subr.bf16.mxu0 0
  %714 = vmatpush1.bf16.msra.mxu0 %v692
  %715 = vmatprep.subr.bf16.mxu0 0
  %716 = vmatpush1.bf16.msra.mxu0 %v691
  %717 = vmatprep.subr.bf16.mxu0 0
  %718 = vmatpush1.bf16.msra.mxu0 %v690
  %719 = vmatprep.subr.bf16.mxu0 0
  %720 = vmatpush1.bf16.msra.mxu0 %v689
  %721 = vmatprep.subr.bf16.mxu0 0
  %722 = vmatpush2.bf16.msra.mxu0 0
  %723 = vmatprep.subr.bf16.mxu0 0
  %724 = vmatpush2.bf16.msra.mxu0 0
  %725 = vmatprep.subr.bf16.mxu0 0
  %726 = vmatpush2.bf16.msra.mxu0 0
  %727 = vmatprep.subr.bf16.mxu0 0
  %728 = vmatpush2.bf16.msra.mxu0 0
  %729 = vmatprep.subr.bf16.mxu0 0
  %730 = vmatpush2.bf16.msra.mxu0 0
  %731 = vmatprep.subr.bf16.mxu0 0
  %732 = vmatpush2.bf16.msra.mxu0 0
  %733 = vmatprep.subr.bf16.mxu0 0
  %734 = vmatpush2.bf16.msra.mxu0 0
  %735 = vmatprep.subr.bf16.mxu0 0
  %736 = vmatpush2.bf16.msra.mxu0 0
  %737 = vmatprep.mubr.bf16.mxu0 0
  %738 = vmatmul.mubr.bf16.gmra.mxu0 %v618
  %v739 = vpop.f32.mrf.mxu0
  %v740 = vadd.f32 %v655, %v739
  %v741 = vpop.f32.mrf.mxu0
  %v742 = vpop.f32.mrf.mxu0
  %v743 = vadd.f32 %v655, %v742
  %v744 = vpop.f32.mrf.mxu0
  %745 = vmatprep.mubr.bf16.mxu0 0
  %746 = vmatmul.mubr.bf16.gmra.mxu0 %v619
  %v747 = vpop.f32.mrf.mxu0
  %v748 = vadd.f32 %v655, %v747
  %v749 = vpop.f32.mrf.mxu0
  %v750 = vpop.f32.mrf.mxu0
  %v751 = vadd.f32 %v655, %v750
  %v752 = vpop.f32.mrf.mxu0
  %753 = vmatprep.mubr.bf16.mxu0 0
  %754 = vmatmul.mubr.bf16.gmra.mxu0 %v620
  %v755 = vpop.f32.mrf.mxu0
  %v756 = vadd.f32 %v655, %v755
  %v757 = vpop.f32.mrf.mxu0
  %v758 = vpop.f32.mrf.mxu0
  %v759 = vadd.f32 %v655, %v758
  %v760 = vpop.f32.mrf.mxu0
  %761 = vmatprep.mubr.bf16.mxu0 0
  %762 = vmatmul.mubr.bf16.gmra.mxu0 %v621
  %v763 = vpop.f32.mrf.mxu0
  %v764 = vadd.f32 %v655, %v763
  %v765 = vpop.f32.mrf.mxu0
  %v766 = vpop.f32.mrf.mxu0
  %v767 = vadd.f32 %v655, %v766
  %v768 = vpop.f32.mrf.mxu0
  %769 = vmatprep.mubr.bf16.mxu0 0
  %770 = vmatmul.mubr.bf16.gmra.mxu0 %v622
  %v771 = vpop.f32.mrf.mxu0
  %v772 = vadd.f32 %v655, %v771
  %v773 = vpop.f32.mrf.mxu0
  %v774 = vpop.f32.mrf.mxu0
  %v775 = vadd.f32 %v655, %v774
  %v776 = vpop.f32.mrf.mxu0
  %777 = vmatprep.mubr.bf16.mxu0 0
  %778 = vmatmul.mubr.bf16.gmra.mxu0 %v623
  %v779 = vpop.f32.mrf.mxu0
  %v780 = vadd.f32 %v655, %v779
  %v781 = vpop.f32.mrf.mxu0
  %v782 = vpop.f32.mrf.mxu0
  %v783 = vadd.f32 %v655, %v782
  %v784 = vpop.f32.mrf.mxu0
  %785 = vmatprep.mubr.bf16.mxu0 0
  %786 = vmatmul.mubr.bf16.gmra.mxu0 %v624
  %v787 = vpop.f32.mrf.mxu0
  %v788 = vadd.f32 %v655, %v787
  %v789 = vpop.f32.mrf.mxu0
  %v790 = vpop.f32.mrf.mxu0
  %v791 = vadd.f32 %v655, %v790
  %v792 = vpop.f32.mrf.mxu0
  %793 = vmatprep.mubr.bf16.mxu0 0
  %794 = vmatmul.mubr.bf16.gmra.mxu0 %v625
  %v795 = vpop.f32.mrf.mxu0
  %v796 = vadd.f32 %v655, %v795
  %v797 = vpop.f32.mrf.mxu0
  %v798 = vpop.f32.mrf.mxu0
  %v799 = vadd.f32 %v655, %v798
  %v800 = vpop.f32.mrf.mxu0
  %801 = vmatprep.mubr.bf16.mxu0 0
  %802 = vmatmul.mubr.bf16.gmra.mxu0 %v626
  %v803 = vpop.f32.mrf.mxu0
  %v804 = vadd.f32 %v655, %v803
  %v805 = vpop.f32.mrf.mxu0
  %v806 = vpop.f32.mrf.mxu0
  %v807 = vadd.f32 %v655, %v806
  %v808 = vpop.f32.mrf.mxu0
  %809 = vmatprep.mubr.bf16.mxu0 0
  %810 = vmatmul.mubr.bf16.gmra.mxu0 %v627
  %v811 = vpop.f32.mrf.mxu0
  %v812 = vadd.f32 %v655, %v811
  %v813 = vpop.f32.mrf.mxu0
  %v814 = vpop.f32.mrf.mxu0
  %v815 = vadd.f32 %v655, %v814
  %v816 = vpop.f32.mrf.mxu0
  %817 = vmatprep.mubr.bf16.mxu0 0
  %818 = vmatmul.mubr.bf16.gmra.mxu0 %v628
  %v819 = vpop.f32.mrf.mxu0
  %v820 = vadd.f32 %v655, %v819
  %v821 = vpop.f32.mrf.mxu0
  %v822 = vpop.f32.mrf.mxu0
  %v823 = vadd.f32 %v655, %v822
  %v824 = vpop.f32.mrf.mxu0
  %825 = vmatprep.mubr.bf16.mxu0 0
  %826 = vmatmul.mubr.bf16.gmra.mxu0 %v629
  %v827 = vpop.f32.mrf.mxu0
  %v828 = vadd.f32 %v655, %v827
  %v829 = vpop.f32.mrf.mxu0
  %v830 = vpop.f32.mrf.mxu0
  %v831 = vadd.f32 %v655, %v830
  %v832 = vpop.f32.mrf.mxu0
  %833 = vmatprep.mubr.bf16.mxu0 0
  %834 = vmatmul.mubr.bf16.gmra.mxu0 %v630
  %v835 = vpop.f32.mrf.mxu0
  %v836 = vadd.f32 %v655, %v835
  %v837 = vpop.f32.mrf.mxu0
  %v838 = vpop.f32.mrf.mxu0
  %v839 = vadd.f32 %v655, %v838
  %v840 = vpop.f32.mrf.mxu0
  %841 = vmatprep.mubr.bf16.mxu0 0
  %842 = vmatmul.mubr.bf16.gmra.mxu0 %v631
  %v843 = vpop.f32.mrf.mxu0
  %v844 = vadd.f32 %v655, %v843
  %v845 = vpop.f32.mrf.mxu0
  %v846 = vpop.f32.mrf.mxu0
  %v847 = vadd.f32 %v655, %v846
  %v848 = vpop.f32.mrf.mxu0
  %849 = vmatprep.mubr.bf16.mxu0 0
  %850 = vmatmul.mubr.bf16.gmra.mxu0 %v632
  %v851 = vpop.f32.mrf.mxu0
  %v852 = vadd.f32 %v655, %v851
  %v853 = vpop.f32.mrf.mxu0
  %v854 = vpop.f32.mrf.mxu0
  %v855 = vadd.f32 %v655, %v854
  %v856 = vpop.f32.mrf.mxu0
  %857 = vmatprep.mubr.bf16.mxu0 0
  %858 = vmatmul.mubr.bf16.gmra.mxu0 %v633
  %v859 = vpop.f32.mrf.mxu0
  %v860 = vadd.f32 %v655, %v859
  %v861 = vpop.f32.mrf.mxu0
  %v862 = vpop.f32.mrf.mxu0
  %v863 = vadd.f32 %v655, %v862
  %v864 = vpop.f32.mrf.mxu0
  %865 = vdwg.mxu0
  %v866 = vmax.f32 %v740, 0.0
  %v867 = vmax.f32 %v743, 0.0
  %v868 = vmax.f32 %v748, 0.0
  %v869 = vmax.f32 %v751, 0.0
  %v870 = vmax.f32 %v756, 0.0
  %v871 = vmax.f32 %v759, 0.0
  %v872 = vmax.f32 %v764, 0.0
  %v873 = vmax.f32 %v767, 0.0
  %v874 = vmax.f32 %v772, 0.0
  %v875 = vmax.f32 %v775, 0.0
  %v876 = vmax.f32 %v780, 0.0
  %v877 = vmax.f32 %v783, 0.0
  %v878 = vmax.f32 %v788, 0.0
  %v879 = vmax.f32 %v791, 0.0
  %v880 = vmax.f32 %v796, 0.0
  %v881 = vmax.f32 %v799, 0.0
  %v882 = vmax.f32 %v804, 0.0
  %v883 = vmax.f32 %v807, 0.0
  %v884 = vmax.f32 %v812, 0.0
  %v885 = vmax.f32 %v815, 0.0
  %v886 = vmax.f32 %v820, 0.0
  %v887 = vmax.f32 %v823, 0.0
  %v888 = vmax.f32 %v828, 0.0
  %v889 = vmax.f32 %v831, 0.0
  %v890 = vmax.f32 %v836, 0.0
  %v891 = vmax.f32 %v839, 0.0
  %v892 = vmax.f32 %v844, 0.0
  %v893 = vmax.f32 %v847, 0.0
  %v894 = vmax.f32 %v852, 0.0
  %v895 = vmax.f32 %v855, 0.0
  %v896 = vmax.f32 %v860, 0.0
  %v897 = vmax.f32 %v863, 0.0
  %v898 = vpack.c.bf16 %v867, %v866
  %v899 = vpack.c.bf16 %v869, %v868
  %v900 = vpack.c.bf16 %v871, %v870
  %v901 = vpack.c.bf16 %v873, %v872
  %v902 = vpack.c.bf16 %v875, %v874
  %v903 = vpack.c.bf16 %v877, %v876
  %v904 = vpack.c.bf16 %v879, %v878
  %v905 = vpack.c.bf16 %v881, %v880
  %v906 = vpack.c.bf16 %v883, %v882
  %v907 = vpack.c.bf16 %v885, %v884
  %v908 = vpack.c.bf16 %v887, %v886
  %v909 = vpack.c.bf16 %v889, %v888
  %v910 = vpack.c.bf16 %v891, %v890
  %v911 = vpack.c.bf16 %v893, %v892
  %v912 = vpack.c.bf16 %v895, %v894
  %v913 = vpack.c.bf16 %v897, %v896
  %v914 = vld [vmem:[%s7] sm:$0xf]
  %v915 = vld [vmem:[%s7 + $0x4] sm:$0xf]
  %v916 = vld [vmem:[%s7 + $0x8] sm:$0xf]
  %v917 = vld [vmem:[%s7 + $0xc] sm:$0xf]
  %v918 = vld [vmem:[%s7 + $0x10] sm:$0xf]
  %v919 = vld [vmem:[%s7 + $0x14] sm:$0xf]
  %v920 = vld [vmem:[%s7 + $0x18] sm:$0xf]
  %v921 = vld [vmem:[%s7 + $0x1c] sm:$0xf]
  %v922 = vld [vmem:[%s7 + $0x20] sm:$0xf]
  %v923 = vld [vmem:[%s7 + $0x24] sm:$0xf]
  %v924 = vld [vmem:[%s7 + $0x28] sm:$0xf]
  %v925 = vld [vmem:[%s7 + $0x2c] sm:$0xf]
  %v926 = vld [vmem:[%s7 + $0x30] sm:$0xf]
  %v927 = vld [vmem:[%s7 + $0x34] sm:$0xf]
  %v928 = vld [vmem:[%s7 + $0x38] sm:$0xf]
  %v929 = vld [vmem:[%s7 + $0x3c] sm:$0xf]
  %v930 = vld [vmem:[%s8] sm:$0x1]
  %v932 = vlaneseq
  %v933 = vshrl.u32 %v932, 7
  %v934 = vsub.s32 0, %v933
  %v935 = vrot.slane %v930, %v934
  %v953 = vunpack.c.l.b16 %v914
  %v954 = vunpack.c.l.b16 %v915
  %v955 = vunpack.c.l.b16 %v916
  %v956 = vunpack.c.l.b16 %v917
  %v957 = vunpack.c.l.b16 %v918
  %v958 = vunpack.c.l.b16 %v919
  %v959 = vunpack.c.l.b16 %v920
  %v960 = vunpack.c.l.b16 %v921
  %v961 = vunpack.c.l.b16 %v922
  %v962 = vunpack.c.l.b16 %v923
  %v963 = vunpack.c.l.b16 %v924
  %v964 = vunpack.c.l.b16 %v925
  %v965 = vunpack.c.l.b16 %v926
  %v966 = vunpack.c.l.b16 %v927
  %v967 = vunpack.c.l.b16 %v928
  %v968 = vunpack.c.l.b16 %v929
  %v969 = vpack.c.b16 %v954, %v953
  %v970 = vpack.c.b16 %v956, %v955
  %v971 = vpack.c.b16 %v958, %v957
  %v972 = vpack.c.b16 %v960, %v959
  %v973 = vpack.c.b16 %v962, %v961
  %v974 = vpack.c.b16 %v964, %v963
  %v975 = vpack.c.b16 %v966, %v965
  %v976 = vpack.c.b16 %v968, %v967
  %985 = vmatprep.subr.bf16.mxu0 0
  %986 = vmatpush1.bf16.msra.mxu0 %v976
  %987 = vmatprep.subr.bf16.mxu0 0
  %988 = vmatpush1.bf16.msra.mxu0 %v975
  %989 = vmatprep.subr.bf16.mxu0 0
  %990 = vmatpush1.bf16.msra.mxu0 %v974
  %991 = vmatprep.subr.bf16.mxu0 0
  %992 = vmatpush1.bf16.msra.mxu0 %v973
  %993 = vmatprep.subr.bf16.mxu0 0
  %994 = vmatpush1.bf16.msra.mxu0 %v972
  %995 = vmatprep.subr.bf16.mxu0 0
  %996 = vmatpush1.bf16.msra.mxu0 %v971
  %997 = vmatprep.subr.bf16.mxu0 0
  %998 = vmatpush1.bf16.msra.mxu0 %v970
  %999 = vmatprep.subr.bf16.mxu0 0
  %1000 = vmatpush1.bf16.msra.mxu0 %v969
  %1001 = vmatprep.subr.bf16.mxu0 0
  %1002 = vmatpush2.bf16.msra.mxu0 0
  %1003 = vmatprep.subr.bf16.mxu0 0
  %1004 = vmatpush2.bf16.msra.mxu0 0
  %1005 = vmatprep.subr.bf16.mxu0 0
  %1006 = vmatpush2.bf16.msra.mxu0 0
  %1007 = vmatprep.subr.bf16.mxu0 0
  %1008 = vmatpush2.bf16.msra.mxu0 0
  %1009 = vmatprep.subr.bf16.mxu0 0
  %1010 = vmatpush2.bf16.msra.mxu0 0
  %1011 = vmatprep.subr.bf16.mxu0 0
  %1012 = vmatpush2.bf16.msra.mxu0 0
  %1013 = vmatprep.subr.bf16.mxu0 0
  %1014 = vmatpush2.bf16.msra.mxu0 0
  %1015 = vmatprep.subr.bf16.mxu0 0
  %1016 = vmatpush2.bf16.msra.mxu0 0
  %1017 = vmatprep.mubr.bf16.mxu0 0
  %1018 = vmatmul.mubr.bf16.gmra.mxu0 %v898
  %v1019 = vpop.f32.mrf.mxu0
  %v1020 = vadd.f32 %v935, %v1019
  %v1021 = vpop.f32.mrf.mxu0
  %v1022 = vpop.f32.mrf.mxu0
  %v1023 = vadd.f32 %v935, %v1022
  %v1024 = vpop.f32.mrf.mxu0
  %1025 = vmatprep.mubr.bf16.mxu0 0
  %1026 = vmatmul.mubr.bf16.gmra.mxu0 %v899
  %v1027 = vpop.f32.mrf.mxu0
  %v1028 = vadd.f32 %v935, %v1027
  %v1029 = vpop.f32.mrf.mxu0
  %v1030 = vpop.f32.mrf.mxu0
  %v1031 = vadd.f32 %v935, %v1030
  %v1032 = vpop.f32.mrf.mxu0
  %1033 = vmatprep.mubr.bf16.mxu0 0
  %1034 = vmatmul.mubr.bf16.gmra.mxu0 %v900
  %v1035 = vpop.f32.mrf.mxu0
  %v1036 = vadd.f32 %v935, %v1035
  %v1037 = vpop.f32.mrf.mxu0
  %v1038 = vpop.f32.mrf.mxu0
  %v1039 = vadd.f32 %v935, %v1038
  %v1040 = vpop.f32.mrf.mxu0
  %1041 = vmatprep.mubr.bf16.mxu0 0
  %1042 = vmatmul.mubr.bf16.gmra.mxu0 %v901
  %v1043 = vpop.f32.mrf.mxu0
  %v1044 = vadd.f32 %v935, %v1043
  %v1045 = vpop.f32.mrf.mxu0
  %v1046 = vpop.f32.mrf.mxu0
  %v1047 = vadd.f32 %v935, %v1046
  %v1048 = vpop.f32.mrf.mxu0
  %1049 = vmatprep.mubr.bf16.mxu0 0
  %1050 = vmatmul.mubr.bf16.gmra.mxu0 %v902
  %v1051 = vpop.f32.mrf.mxu0
  %v1052 = vadd.f32 %v935, %v1051
  %v1053 = vpop.f32.mrf.mxu0
  %v1054 = vpop.f32.mrf.mxu0
  %v1055 = vadd.f32 %v935, %v1054
  %v1056 = vpop.f32.mrf.mxu0
  %1057 = vmatprep.mubr.bf16.mxu0 0
  %1058 = vmatmul.mubr.bf16.gmra.mxu0 %v903
  %v1059 = vpop.f32.mrf.mxu0
  %v1060 = vadd.f32 %v935, %v1059
  %v1061 = vpop.f32.mrf.mxu0
  %v1062 = vpop.f32.mrf.mxu0
  %v1063 = vadd.f32 %v935, %v1062
  %v1064 = vpop.f32.mrf.mxu0
  %1065 = vmatprep.mubr.bf16.mxu0 0
  %1066 = vmatmul.mubr.bf16.gmra.mxu0 %v904
  %v1067 = vpop.f32.mrf.mxu0
  %v1068 = vadd.f32 %v935, %v1067
  %v1069 = vpop.f32.mrf.mxu0
  %v1070 = vpop.f32.mrf.mxu0
  %v1071 = vadd.f32 %v935, %v1070
  %v1072 = vpop.f32.mrf.mxu0
  %1073 = vmatprep.mubr.bf16.mxu0 0
  %1074 = vmatmul.mubr.bf16.gmra.mxu0 %v905
  %v1075 = vpop.f32.mrf.mxu0
  %v1076 = vadd.f32 %v935, %v1075
  %v1077 = vpop.f32.mrf.mxu0
  %v1078 = vpop.f32.mrf.mxu0
  %v1079 = vadd.f32 %v935, %v1078
  %v1080 = vpop.f32.mrf.mxu0
  %1081 = vmatprep.mubr.bf16.mxu0 0
  %1082 = vmatmul.mubr.bf16.gmra.mxu0 %v906
  %v1083 = vpop.f32.mrf.mxu0
  %v1084 = vadd.f32 %v935, %v1083
  %v1085 = vpop.f32.mrf.mxu0
  %v1086 = vpop.f32.mrf.mxu0
  %v1087 = vadd.f32 %v935, %v1086
  %v1088 = vpop.f32.mrf.mxu0
  %1089 = vmatprep.mubr.bf16.mxu0 0
  %1090 = vmatmul.mubr.bf16.gmra.mxu0 %v907
  %v1091 = vpop.f32.mrf.mxu0
  %v1092 = vadd.f32 %v935, %v1091
  %v1093 = vpop.f32.mrf.mxu0
  %v1094 = vpop.f32.mrf.mxu0
  %v1095 = vadd.f32 %v935, %v1094
  %v1096 = vpop.f32.mrf.mxu0
  %1097 = vmatprep.mubr.bf16.mxu0 0
  %1098 = vmatmul.mubr.bf16.gmra.mxu0 %v908
  %v1099 = vpop.f32.mrf.mxu0
  %v1100 = vadd.f32 %v935, %v1099
  %v1101 = vpop.f32.mrf.mxu0
  %v1102 = vpop.f32.mrf.mxu0
  %v1103 = vadd.f32 %v935, %v1102
  %v1104 = vpop.f32.mrf.mxu0
  %1105 = vmatprep.mubr.bf16.mxu0 0
  %1106 = vmatmul.mubr.bf16.gmra.mxu0 %v909
  %v1107 = vpop.f32.mrf.mxu0
  %v1108 = vadd.f32 %v935, %v1107
  %v1109 = vpop.f32.mrf.mxu0
  %v1110 = vpop.f32.mrf.mxu0
  %v1111 = vadd.f32 %v935, %v1110
  %v1112 = vpop.f32.mrf.mxu0
  %1113 = vmatprep.mubr.bf16.mxu0 0
  %1114 = vmatmul.mubr.bf16.gmra.mxu0 %v910
  %v1115 = vpop.f32.mrf.mxu0
  %v1116 = vadd.f32 %v935, %v1115
  %v1117 = vpop.f32.mrf.mxu0
  %v1118 = vpop.f32.mrf.mxu0
  %v1119 = vadd.f32 %v935, %v1118
  %v1120 = vpop.f32.mrf.mxu0
  %1121 = vmatprep.mubr.bf16.mxu0 0
  %1122 = vmatmul.mubr.bf16.gmra.mxu0 %v911
  %v1123 = vpop.f32.mrf.mxu0
  %v1124 = vadd.f32 %v935, %v1123
  %v1125 = vpop.f32.mrf.mxu0
  %v1126 = vpop.f32.mrf.mxu0
  %v1127 = vadd.f32 %v935, %v1126
  %v1128 = vpop.f32.mrf.mxu0
  %1129 = vmatprep.mubr.bf16.mxu0 0
  %1130 = vmatmul.mubr.bf16.gmra.mxu0 %v912
  %v1131 = vpop.f32.mrf.mxu0
  %v1132 = vadd.f32 %v935, %v1131
  %v1133 = vpop.f32.mrf.mxu0
  %v1134 = vpop.f32.mrf.mxu0
  %v1135 = vadd.f32 %v935, %v1134
  %v1136 = vpop.f32.mrf.mxu0
  %1137 = vmatprep.mubr.bf16.mxu0 0
  %1138 = vmatmul.mubr.bf16.gmra.mxu0 %v913
  %v1139 = vpop.f32.mrf.mxu0
  %v1140 = vadd.f32 %v935, %v1139
  %v1141 = vpop.f32.mrf.mxu0
  %v1142 = vpop.f32.mrf.mxu0
  %v1143 = vadd.f32 %v935, %v1142
  %v1144 = vpop.f32.mrf.mxu0
  %1145 = vdwg.mxu0
  %vm1146 = vcmask 64512
  %1147 = vst.msk [vmem:[%s9] sm:$0xff] %vm1146, %v1020
  %1148 = vst.msk [vmem:[%s9 + $0x8] sm:$0xff] %vm1146, %v1023
  %1149 = vst.msk [vmem:[%s9 + $0x10] sm:$0xff] %vm1146, %v1028
  %1150 = vst.msk [vmem:[%s9 + $0x18] sm:$0xff] %vm1146, %v1031
  %1151 = vst.msk [vmem:[%s9 + $0x20] sm:$0xff] %vm1146, %v1036
  %1152 = vst.msk [vmem:[%s9 + $0x28] sm:$0xff] %vm1146, %v1039
  %1153 = vst.msk [vmem:[%s9 + $0x30] sm:$0xff] %vm1146, %v1044
  %1154 = vst.msk [vmem:[%s9 + $0x38] sm:$0xff] %vm1146, %v1047
  %1155 = vst.msk [vmem:[%s9 + $0x40] sm:$0xff] %vm1146, %v1052
  %1156 = vst.msk [vmem:[%s9 + $0x48] sm:$0xff] %vm1146, %v1055
  %1157 = vst.msk [vmem:[%s9 + $0x50] sm:$0xff] %vm1146, %v1060
  %1158 = vst.msk [vmem:[%s9 + $0x58] sm:$0xff] %vm1146, %v1063
  %1159 = vst.msk [vmem:[%s9 + $0x60] sm:$0xff] %vm1146, %v1068
  %1160 = vst.msk [vmem:[%s9 + $0x68] sm:$0xff] %vm1146, %v1071
  %1161 = vst.msk [vmem:[%s9 + $0x70] sm:$0xff] %vm1146, %v1076
  %1162 = vst.msk [vmem:[%s9 + $0x78] sm:$0xff] %vm1146, %v1079
  %1163 = vst.msk [vmem:[%s9 + $0x80] sm:$0xff] %vm1146, %v1084
  %1164 = vst.msk [vmem:[%s9 + $0x88] sm:$0xff] %vm1146, %v1087
  %1165 = vst.msk [vmem:[%s9 + $0x90] sm:$0xff] %vm1146, %v1092
  %1166 = vst.msk [vmem:[%s9 + $0x98] sm:$0xff] %vm1146, %v1095
  %1167 = vst.msk [vmem:[%s9 + $0xa0] sm:$0xff] %vm1146, %v1100
  %1168 = vst.msk [vmem:[%s9 + $0xa8] sm:$0xff] %vm1146, %v1103
  %1169 = vst.msk [vmem:[%s9 + $0xb0] sm:$0xff] %vm1146, %v1108
  %1170 = vst.msk [vmem:[%s9 + $0xb8] sm:$0xff] %vm1146, %v1111
  %1171 = vst.msk [vmem:[%s9 + $0xc0] sm:$0xff] %vm1146, %v1116
  %1172 = vst.msk [vmem:[%s9 + $0xc8] sm:$0xff] %vm1146, %v1119
  %1173 = vst.msk [vmem:[%s9 + $0xd0] sm:$0xff] %vm1146, %v1124
  %1174 = vst.msk [vmem:[%s9 + $0xd8] sm:$0xff] %vm1146, %v1127
  %1175 = vst.msk [vmem:[%s9 + $0xe0] sm:$0xff] %vm1146, %v1132
  %1176 = vst.msk [vmem:[%s9 + $0xe8] sm:$0xff] %vm1146, %v1135
  %1177 = vst.msk [vmem:[%s9 + $0xf0] sm:$0xff] %vm1146, %v1140
  %1178 = vst.msk [vmem:[%s9 + $0xf8] sm:$0xff] %vm1146, %v1143
  // Predicated region
  $region38: #{battlenet_forward.1} parent=0 // pred_check
    _
  $region39: #{battlenet_forward.1} parent=0 // pred_check_branch
    %1180 = sbr.rel (0) target = $region41
  $region40: #{battlenet_forward.1} parent=0 // pred_region
    _
  $region41: #{battlenet_forward.1} parent=0 // pred_fallthru
    _
  // Predicated region
  $region42: #{battlenet_forward.1} parent=0 // pred_check
    _
  $region43: #{battlenet_forward.1} parent=0 // pred_check_branch
    %1182 = sbr.rel (0) target = $region45
  $region44: #{battlenet_forward.1} parent=0 // pred_region
    _
  $region45: #{battlenet_forward.1} parent=0 // pred_fallthru
    _

</llo_original>
